<compile_context>
chip_gen: v7x
topology: tpu7x:2x2x1
jax: 0.10.0
libtpu: 0.0.40
codegen_flags: <defaults>
</compile_context>

<pallas_src>
import jax
import jax.numpy as jnp
from jax.experimental import pallas as pl
from jax.experimental.pallas import tpu as pltpu

# ----------------------------------------------------------------------------
# Model hyper-parameters (implied by the Test module)
# ----------------------------------------------------------------------------
B = 2
C_IN, L_IN = 4, 16
K, STRIDE = 3, 2
O1, O2, O3 = 8, 16, 32
LATENT = 16               # latent size (e2_o)
FLAT = O3 * 1             # encoder output flattens to 32
X_FLAT = C_IN * L_IN      # 64

N_STAGES = 9              # 10 matmul stages, last two fused at pack time
PADW = 128                # every stage padded to a (128, 128) block of the slab
MU_OFF = X_FLAT           # 64  : mu offset in the fused output slab
LV_OFF = X_FLAT + LATENT  # 80  : logvar offset
PAD_OFF = LV_OFF + LATENT # 96  : zero-filled tail start


# ----------------------------------------------------------------------------
# Fused Pallas kernel: the whole forward pass, straight-line, all in VMEM.
# ----------------------------------------------------------------------------
def _fused_vae_kernel(x_ref, eps_ref, w_ref, b_ref, out_ref):
    def dense(h, i, rows, relu):
        # Stage i lives at rows [i*128, i*128+rows) of the bf16 weight slab.
        w = w_ref[pl.ds(i * PADW, rows), :]                 # (rows, 128) bf16
        b = b_ref[pl.ds(i, 1), :]                           # (1, 128)    f32
        y = jnp.dot(h.astype(w_ref.dtype), w,
                    preferred_element_type=jnp.float32) + b
        return jnp.maximum(y, 0.0) if relu else y

    # ---- encode: convs as unrolled matmuls on channel-major flat layout ----
    h = x_ref[...]                                          # (B, 64) f32
    h = dense(h, 0, X_FLAT, True)      # Conv1d(4->8,k3,s2)+ReLU    valid cols [:56]
    h = dense(h, 1, PADW, True)        # Conv1d(8->16,k3,s2)+ReLU   valid cols [:48]
    h = dense(h, 2, PADW, True)        # Conv1d(16->32,k3,s2)+ReLU  valid cols [:32]
    head = dense(h, 3, PADW, False)    # fused [mu | logvar] head   valid cols [:32]
    mu = jnp.maximum(head[:, :LATENT], 0.0)                 # ReLU on mu (per spec)
    logvar = head[:, LATENT:2 * LATENT]

    # ---- sample: z = eps * exp(0.5*logvar) + mu  (EUP exp + VPU FMA, f32) ----
    z = eps_ref[...] * jnp.exp(0.5 * logvar) + mu           # (B, 16) f32

    # ---- decode ----
    d = dense(z, 4, LATENT, True)      # Linear(16->16)+ReLU        valid cols [:16]
    d = dense(d, 5, PADW, True)        # Linear(16->32)+ReLU        valid cols [:32]
    d = dense(d, 6, PADW, True)        # ConvT1d(32->16,k3,s2)+ReLU valid cols [:48]
    d = dense(d, 7, PADW, True)        # ConvT1d(16->8,k3,s2)+ReLU  valid cols [:56]
    d = dense(d, 8, PADW, False)       # fused ConvT1d(8->4)∘Linear valid cols [:64]

    # ---- softmax over channels of (B, C, L) stored as (B, C*L) flat ----
    chans = [d[:, c * L_IN:(c + 1) * L_IN] for c in range(C_IN)]
    m = chans[0]
    for c in chans[1:]:
        m = jnp.maximum(m, c)
    exps = [jnp.exp(c - m) for c in chans]
    s = exps[0]
    for e in exps[1:]:
        s = s + e
    inv = pl.reciprocal(s)                                  # one reciprocal + 4 muls

    # ---- single lane-dense output slab: [decoded | mu | logvar | zeros] ----
    for c in range(C_IN):
        out_ref[:, pl.ds(c * L_IN, L_IN)] = (exps[c] * inv).astype(out_ref.dtype)
    out_ref[:, pl.ds(MU_OFF, LATENT)] = mu.astype(out_ref.dtype)
    out_ref[:, pl.ds(LV_OFF, LATENT)] = logvar.astype(out_ref.dtype)
    out_ref[:, pl.ds(PAD_OFF, PADW - PAD_OFF)] = jnp.zeros(
        (B, PADW - PAD_OFF), out_ref.dtype)


def fused_forward(w_slab, b_slab, x, eps):
    """One grid-less pallas_call for the whole forward."""
    x_flat = x.reshape(B, X_FLAT)                           # channel-major flatten
    vmem = pl.BlockSpec(memory_space=pltpu.MemorySpace.VMEM)
    out = pl.pallas_call(
        _fused_vae_kernel,
        out_shape=jax.ShapeDtypeStruct((B, PADW), jnp.float32),
        in_specs=[vmem, vmem, vmem, vmem],
        out_specs=vmem,
    )(x_flat, eps, w_slab, b_slab)
    decoded = out[:, :X_FLAT].reshape(B, C_IN, L_IN)
    mu = out[:, MU_OFF:MU_OFF + LATENT]
    logvar = out[:, LV_OFF:LV_OFF + LATENT]
    return decoded, mu, logvar


# ----------------------------------------------------------------------------
# One-time weight packing: convs / deconvs -> unrolled (Cin*Lin, Cout*Lout) mats,
# then all stages stacked into one 128-aligned bf16 slab + one f32 bias slab.
# ----------------------------------------------------------------------------
def unroll_conv1d(w, b, L_in, stride):
    """w:(Cout,Cin,K) PyTorch Conv1d. Returns W:(Cin*Lin, Cout*Lout), b:(1, Cout*Lout)."""
    Cout, Cin, Kk = w.shape
    L_out = (L_in - Kk) // stride + 1
    li = jnp.arange(L_in)[:, None]
    lo = jnp.arange(L_out)[None, :]
    kk = li - lo * stride                                   # (L_in, L_out)
    valid = (kk >= 0) & (kk < Kk)
    wg = w[:, :, jnp.clip(kk, 0, Kk - 1)]                   # (Cout, Cin, L_in, L_out)
    wg = jnp.where(valid[None, None], wg, 0.0)
    W = jnp.transpose(wg, (1, 2, 0, 3)).reshape(Cin * L_in, Cout * L_out)
    bu = jnp.repeat(b, L_out).reshape(1, Cout * L_out)
    return W.astype(jnp.float32), bu.astype(jnp.float32), L_out


def unroll_conv_transpose1d(w, b, L_in, stride, output_padding):
    """w:(Cin,Cout,K) PyTorch ConvTranspose1d (padding=0)."""
    Cin, Cout, Kk = w.shape
    L_out = (L_in - 1) * stride + Kk + output_padding
    li = jnp.arange(L_in)[:, None]
    j = jnp.arange(L_out)[None, :]
    kk = j - li * stride                                    # (L_in, L_out)
    valid = (kk >= 0) & (kk < Kk)
    wg = w[:, :, jnp.clip(kk, 0, Kk - 1)]                   # (Cin, Cout, L_in, L_out)
    wg = jnp.where(valid[None, None], wg, 0.0)
    W = jnp.transpose(wg, (0, 2, 1, 3)).reshape(Cin * L_in, Cout * L_out)
    bu = jnp.repeat(b, L_out).reshape(1, Cout * L_out)
    return W.astype(jnp.float32), bu.astype(jnp.float32), L_out


def init_params():
    keys = jax.random.split(jax.random.PRNGKey(42), 32)
    kit = iter(keys)

    def nrm(shape, scale=0.1):
        return (scale * jax.random.normal(next(kit), shape)).astype(jnp.float32)

    p = {}
    # encoder convs (Cout, Cin, k)
    p["c1_w"], p["c1_b"] = nrm((O1, C_IN, K)), nrm((O1,))
    p["c2_w"], p["c2_b"] = nrm((O2, O1, K)), nrm((O2,))
    p["c3_w"], p["c3_b"] = nrm((O3, O2, K)), nrm((O3,))
    # encoder heads
    p["mu_w"], p["mu_b"] = nrm((FLAT, LATENT)), nrm((LATENT,))
    p["lv_w"], p["lv_b"] = nrm((FLAT, LATENT)), nrm((LATENT,))
    # decoder linears
    p["d1_w"], p["d1_b"] = nrm((LATENT, LATENT)), nrm((LATENT,))
    p["d2_w"], p["d2_b"] = nrm((LATENT, FLAT)), nrm((FLAT,))
    # decoder deconvs (Cin, Cout, k)
    p["t1_w"], p["t1_b"] = nrm((O3, O2, K)), nrm((O2,))
    p["t2_w"], p["t2_b"] = nrm((O2, O1, K)), nrm((O1,))
    p["t3_w"], p["t3_b"] = nrm((O1, C_IN, K)), nrm((C_IN,))
    # final "factor=1" linear on flattened output
    p["f_w"], p["f_b"] = nrm((X_FLAT, X_FLAT)), nrm((X_FLAT,))
    return p


def pack_params(p):
    """Returns (w_slab bf16 (9*128,128), b_slab f32 (9,128)); done ONCE outside jit."""
    stages = []
    W, b, L1 = unroll_conv1d(p["c1_w"], p["c1_b"], L_IN, STRIDE); stages.append((W, b))
    W, b, L2 = unroll_conv1d(p["c2_w"], p["c2_b"], L1, STRIDE);   stages.append((W, b))
    W, b, L3 = unroll_conv1d(p["c3_w"], p["c3_b"], L2, STRIDE);   stages.append((W, b))
    assert L3 == 1
    # fused [mu | logvar] head
    stages.append((jnp.concatenate([p["mu_w"], p["lv_w"]], axis=1),
                   jnp.concatenate([p["mu_b"], p["lv_b"]])))
    stages.append((p["d1_w"], p["d1_b"]))
    stages.append((p["d2_w"], p["d2_b"]))
    W, b, Lt1 = unroll_conv_transpose1d(p["t1_w"], p["t1_b"], 1, STRIDE, 0);   stages.append((W, b))
    W, b, Lt2 = unroll_conv_transpose1d(p["t2_w"], p["t2_b"], Lt1, STRIDE, 0); stages.append((W, b))
    Wt3, bt3, Lt3 = unroll_conv_transpose1d(p["t3_w"], p["t3_b"], Lt2, STRIDE, 1)
    assert Lt3 == L_IN
    # Fuse the two trailing non-ReLU stages (ConvT 8->4 and Linear 64->64) at pack time.
    Wf = Wt3 @ p["f_w"]
    bf = (bt3 @ p["f_w"]).reshape(-1) + p["f_b"]
    stages.append((Wf, bf))
    assert len(stages) == N_STAGES

    w_slab = jnp.zeros((N_STAGES * PADW, PADW), jnp.float32)
    b_slab = jnp.zeros((N_STAGES, PADW), jnp.float32)
    for i, (W, b) in enumerate(stages):
        W = jnp.asarray(W, jnp.float32)
        b = jnp.asarray(b, jnp.float32).reshape(-1)
        r, c = W.shape
        w_slab = w_slab.at[i * PADW:i * PADW + r, :c].set(W)
        b_slab = b_slab.at[i, :c].set(b)
    return w_slab.astype(jnp.bfloat16), b_slab


# ----------------------------------------------------------------------------
# Plain-JAX reference (same packed slabs, mirrors the bf16 operand rounding)
# ----------------------------------------------------------------------------
def reference_forward(w_slab, b_slab, x, eps):
    hi = jax.lax.Precision.HIGHEST
    wf = w_slab.astype(jnp.float32)

    def dense(h, i, rows, relu):
        w = wf[i * PADW:i * PADW + rows, :]
        b = b_slab[i, :]
        hb = h.astype(jnp.bfloat16).astype(jnp.float32)
        y = jnp.dot(hb, w, precision=hi) + b
        return jnp.maximum(y, 0.0) if relu else y

    h = x.reshape(B, X_FLAT)
    h = dense(h, 0, X_FLAT, True)
    h = dense(h, 1, PADW, True)
    h = dense(h, 2, PADW, True)
    head = dense(h, 3, PADW, False)
    mu = jnp.maximum(head[:, :LATENT], 0.0)
    logvar = head[:, LATENT:2 * LATENT]
    z = eps * jnp.exp(0.5 * logvar) + mu
    d = dense(z, 4, LATENT, True)
    d = dense(d, 5, PADW, True)
    d = dense(d, 6, PADW, True)
    d = dense(d, 7, PADW, True)
    d = dense(d, 8, PADW, False)
    dec = jax.nn.softmax(d[:, :X_FLAT].reshape(B, C_IN, L_IN), axis=1)
    return dec, mu, logvar


if __name__ == "__main__":
    key = jax.random.PRNGKey(0)
    kx, keps = jax.random.split(key)
    x = jax.random.normal(kx, (B, C_IN, L_IN), dtype=jnp.float32)
    # deterministic stand-in for torch.randn_like(std) * 0.01
    # TODO(synk): eps could be drawn in-kernel via pltpu.prng_seed + stateful_normal
    # from a scalar seed; kept as an explicit input for exact reference checking.
    eps = 0.01 * jax.random.normal(keps, (B, LATENT), dtype=jnp.float32)

    params = init_params()
    w_slab, b_slab = pack_params(params)          # weight packing hoisted off hot path

    fwd = jax.jit(fused_forward)
    decoded, mu, logvar = fwd(w_slab, b_slab, x, eps)
    jax.block_until_ready((decoded, mu, logvar))

    # shape / semantics checks
    assert decoded.shape == (B, C_IN, L_IN)
    assert mu.shape == (B, LATENT) and logvar.shape == (B, LATENT)
    # channel softmax must sum to 1 at every (batch, position)
    assert jnp.allclose(jnp.sum(decoded, axis=1), 1.0, atol=1e-4)

    # numerics vs plain-JAX reference of the same packed slabs
    dec_r, mu_r, lv_r = reference_forward(w_slab, b_slab, x, eps)
    assert jnp.allclose(decoded, dec_r, atol=1e-2, rtol=1e-2)
    assert jnp.allclose(mu, mu_r, atol=1e-2, rtol=1e-2)
    assert jnp.allclose(logvar, lv_r, atol=1e-2, rtol=1e-2)

    print("KERNEL_OK")
</pallas_src>

<mosaic_0001>
module attributes {stable_mosaic.version = 11 : i64} {
  func.func @_fused_vae_kernel(%arg0: memref<2x64xf32, #tpu.memory_space<vmem>>, %arg1: memref<2x16xf32, #tpu.memory_space<vmem>>, %arg2: memref<1152x128xbf16, #tpu.memory_space<vmem>>, %arg3: memref<9x128xf32, #tpu.memory_space<vmem>>, %arg4: memref<2x128xf32, #tpu.memory_space<vmem>>) attributes {dimension_semantics = [], scalar_prefetch = 0 : i64, scratch_operands = 0 : i64, tpu.core_type = #tpu.core_type<tc>} {
    %c0 = arith.constant 0 : index
    %c0_0 = arith.constant 0 : index
    %0 = vector.load %arg0[%c0, %c0_0] : memref<2x64xf32, #tpu.memory_space<vmem>>, vector<2x64xf32>
    %c0_1 = arith.constant 0 : index
    %c0_2 = arith.constant 0 : index
    %1 = vector.load %arg2[%c0_1, %c0_2] : memref<1152x128xbf16, #tpu.memory_space<vmem>>, vector<64x128xbf16>
    %c0_3 = arith.constant 0 : index
    %c0_4 = arith.constant 0 : index
    %2 = vector.load %arg3[%c0_3, %c0_4] : memref<9x128xf32, #tpu.memory_space<vmem>>, vector<1x128xf32>
    %3 = arith.truncf %0 : vector<2x64xf32> to vector<2x64xbf16>
    %cst = arith.constant dense<0.000000e+00> : vector<2x128xf32>
    %4 = tpu.matmul %3, %1, %cst {dimension_numbers = #tpu.dot_dimension_numbers<[1], [0], [0], [1], [0, 0, 1, 1], [], []>} : vector<2x64xbf16>, vector<64x128xbf16>, vector<2x128xf32> -> vector<2x128xf32>
    %5 = vector.broadcast %2 : vector<1x128xf32> to vector<2x128xf32>
    %6 = arith.addf %4, %5 : vector<2x128xf32>
    %cst_5 = arith.constant 0.000000e+00 : f32
    %7 = vector.broadcast %cst_5 : f32 to vector<2x128xf32>
    %8 = arith.maximumf %6, %7 : vector<2x128xf32>
    %c128 = arith.constant 128 : index
    %c0_6 = arith.constant 0 : index
    %9 = vector.load %arg2[%c128, %c0_6] : memref<1152x128xbf16, #tpu.memory_space<vmem>>, vector<128x128xbf16>
    %c1 = arith.constant 1 : index
    %c0_7 = arith.constant 0 : index
    %10 = vector.load %arg3[%c1, %c0_7] : memref<9x128xf32, #tpu.memory_space<vmem>>, vector<1x128xf32>
    %11 = arith.truncf %8 : vector<2x128xf32> to vector<2x128xbf16>
    %cst_8 = arith.constant dense<0.000000e+00> : vector<2x128xf32>
    %12 = tpu.matmul %11, %9, %cst_8 {dimension_numbers = #tpu.dot_dimension_numbers<[1], [0], [0], [1], [0, 0, 1, 1], [], []>} : vector<2x128xbf16>, vector<128x128xbf16>, vector<2x128xf32> -> vector<2x128xf32>
    %13 = vector.broadcast %10 : vector<1x128xf32> to vector<2x128xf32>
    %14 = arith.addf %12, %13 : vector<2x128xf32>
    %cst_9 = arith.constant 0.000000e+00 : f32
    %15 = vector.broadcast %cst_9 : f32 to vector<2x128xf32>
    %16 = arith.maximumf %14, %15 : vector<2x128xf32>
    %c256 = arith.constant 256 : index
    %c0_10 = arith.constant 0 : index
    %17 = vector.load %arg2[%c256, %c0_10] : memref<1152x128xbf16, #tpu.memory_space<vmem>>, vector<128x128xbf16>
    %c2 = arith.constant 2 : index
    %c0_11 = arith.constant 0 : index
    %18 = vector.load %arg3[%c2, %c0_11] : memref<9x128xf32, #tpu.memory_space<vmem>>, vector<1x128xf32>
    %19 = arith.truncf %16 : vector<2x128xf32> to vector<2x128xbf16>
    %cst_12 = arith.constant dense<0.000000e+00> : vector<2x128xf32>
    %20 = tpu.matmul %19, %17, %cst_12 {dimension_numbers = #tpu.dot_dimension_numbers<[1], [0], [0], [1], [0, 0, 1, 1], [], []>} : vector<2x128xbf16>, vector<128x128xbf16>, vector<2x128xf32> -> vector<2x128xf32>
    %21 = vector.broadcast %18 : vector<1x128xf32> to vector<2x128xf32>
    %22 = arith.addf %20, %21 : vector<2x128xf32>
    %cst_13 = arith.constant 0.000000e+00 : f32
    %23 = vector.broadcast %cst_13 : f32 to vector<2x128xf32>
    %24 = arith.maximumf %22, %23 : vector<2x128xf32>
    %c384 = arith.constant 384 : index
    %c0_14 = arith.constant 0 : index
    %25 = vector.load %arg2[%c384, %c0_14] : memref<1152x128xbf16, #tpu.memory_space<vmem>>, vector<128x128xbf16>
    %c3 = arith.constant 3 : index
    %c0_15 = arith.constant 0 : index
    %26 = vector.load %arg3[%c3, %c0_15] : memref<9x128xf32, #tpu.memory_space<vmem>>, vector<1x128xf32>
    %27 = arith.truncf %24 : vector<2x128xf32> to vector<2x128xbf16>
    %cst_16 = arith.constant dense<0.000000e+00> : vector<2x128xf32>
    %28 = tpu.matmul %27, %25, %cst_16 {dimension_numbers = #tpu.dot_dimension_numbers<[1], [0], [0], [1], [0, 0, 1, 1], [], []>} : vector<2x128xbf16>, vector<128x128xbf16>, vector<2x128xf32> -> vector<2x128xf32>
    %29 = vector.broadcast %26 : vector<1x128xf32> to vector<2x128xf32>
    %30 = arith.addf %28, %29 : vector<2x128xf32>
    %31 = vector.extract_strided_slice %30 {offsets = [0, 0], sizes = [2, 16], strides = [1, 1]} : vector<2x128xf32> to vector<2x16xf32>
    %cst_17 = arith.constant 0.000000e+00 : f32
    %32 = vector.broadcast %cst_17 : f32 to vector<2x16xf32>
    %33 = arith.maximumf %31, %32 : vector<2x16xf32>
    %34 = vector.extract_strided_slice %30 {offsets = [0, 16], sizes = [2, 16], strides = [1, 1]} : vector<2x128xf32> to vector<2x16xf32>
    %c0_18 = arith.constant 0 : index
    %c0_19 = arith.constant 0 : index
    %35 = vector.load %arg1[%c0_18, %c0_19] : memref<2x16xf32, #tpu.memory_space<vmem>>, vector<2x16xf32>
    %cst_20 = arith.constant 5.000000e-01 : f32
    %36 = vector.broadcast %cst_20 : f32 to vector<2x16xf32>
    %37 = arith.mulf %36, %34 : vector<2x16xf32>
    %38 = math.exp %37 : vector<2x16xf32>
    %39 = arith.mulf %35, %38 : vector<2x16xf32>
    %40 = arith.addf %39, %33 : vector<2x16xf32>
    %c512 = arith.constant 512 : index
    %c0_21 = arith.constant 0 : index
    %41 = vector.load %arg2[%c512, %c0_21] : memref<1152x128xbf16, #tpu.memory_space<vmem>>, vector<16x128xbf16>
    %c4 = arith.constant 4 : index
    %c0_22 = arith.constant 0 : index
    %42 = vector.load %arg3[%c4, %c0_22] : memref<9x128xf32, #tpu.memory_space<vmem>>, vector<1x128xf32>
    %43 = arith.truncf %40 : vector<2x16xf32> to vector<2x16xbf16>
    %cst_23 = arith.constant dense<0.000000e+00> : vector<2x128xf32>
    %44 = tpu.matmul %43, %41, %cst_23 {dimension_numbers = #tpu.dot_dimension_numbers<[1], [0], [0], [1], [0, 0, 1, 1], [], []>} : vector<2x16xbf16>, vector<16x128xbf16>, vector<2x128xf32> -> vector<2x128xf32>
    %45 = vector.broadcast %42 : vector<1x128xf32> to vector<2x128xf32>
    %46 = arith.addf %44, %45 : vector<2x128xf32>
    %cst_24 = arith.constant 0.000000e+00 : f32
    %47 = vector.broadcast %cst_24 : f32 to vector<2x128xf32>
    %48 = arith.maximumf %46, %47 : vector<2x128xf32>
    %c640 = arith.constant 640 : index
    %c0_25 = arith.constant 0 : index
    %49 = vector.load %arg2[%c640, %c0_25] : memref<1152x128xbf16, #tpu.memory_space<vmem>>, vector<128x128xbf16>
    %c5 = arith.constant 5 : index
    %c0_26 = arith.constant 0 : index
    %50 = vector.load %arg3[%c5, %c0_26] : memref<9x128xf32, #tpu.memory_space<vmem>>, vector<1x128xf32>
    %51 = arith.truncf %48 : vector<2x128xf32> to vector<2x128xbf16>
    %cst_27 = arith.constant dense<0.000000e+00> : vector<2x128xf32>
    %52 = tpu.matmul %51, %49, %cst_27 {dimension_numbers = #tpu.dot_dimension_numbers<[1], [0], [0], [1], [0, 0, 1, 1], [], []>} : vector<2x128xbf16>, vector<128x128xbf16>, vector<2x128xf32> -> vector<2x128xf32>
    %53 = vector.broadcast %50 : vector<1x128xf32> to vector<2x128xf32>
    %54 = arith.addf %52, %53 : vector<2x128xf32>
    %cst_28 = arith.constant 0.000000e+00 : f32
    %55 = vector.broadcast %cst_28 : f32 to vector<2x128xf32>
    %56 = arith.maximumf %54, %55 : vector<2x128xf32>
    %c768 = arith.constant 768 : index
    %c0_29 = arith.constant 0 : index
    %57 = vector.load %arg2[%c768, %c0_29] : memref<1152x128xbf16, #tpu.memory_space<vmem>>, vector<128x128xbf16>
    %c6 = arith.constant 6 : index
    %c0_30 = arith.constant 0 : index
    %58 = vector.load %arg3[%c6, %c0_30] : memref<9x128xf32, #tpu.memory_space<vmem>>, vector<1x128xf32>
    %59 = arith.truncf %56 : vector<2x128xf32> to vector<2x128xbf16>
    %cst_31 = arith.constant dense<0.000000e+00> : vector<2x128xf32>
    %60 = tpu.matmul %59, %57, %cst_31 {dimension_numbers = #tpu.dot_dimension_numbers<[1], [0], [0], [1], [0, 0, 1, 1], [], []>} : vector<2x128xbf16>, vector<128x128xbf16>, vector<2x128xf32> -> vector<2x128xf32>
    %61 = vector.broadcast %58 : vector<1x128xf32> to vector<2x128xf32>
    %62 = arith.addf %60, %61 : vector<2x128xf32>
    %cst_32 = arith.constant 0.000000e+00 : f32
    %63 = vector.broadcast %cst_32 : f32 to vector<2x128xf32>
    %64 = arith.maximumf %62, %63 : vector<2x128xf32>
    %c896 = arith.constant 896 : index
    %c0_33 = arith.constant 0 : index
    %65 = vector.load %arg2[%c896, %c0_33] : memref<1152x128xbf16, #tpu.memory_space<vmem>>, vector<128x128xbf16>
    %c7 = arith.constant 7 : index
    %c0_34 = arith.constant 0 : index
    %66 = vector.load %arg3[%c7, %c0_34] : memref<9x128xf32, #tpu.memory_space<vmem>>, vector<1x128xf32>
    %67 = arith.truncf %64 : vector<2x128xf32> to vector<2x128xbf16>
    %cst_35 = arith.constant dense<0.000000e+00> : vector<2x128xf32>
    %68 = tpu.matmul %67, %65, %cst_35 {dimension_numbers = #tpu.dot_dimension_numbers<[1], [0], [0], [1], [0, 0, 1, 1], [], []>} : vector<2x128xbf16>, vector<128x128xbf16>, vector<2x128xf32> -> vector<2x128xf32>
    %69 = vector.broadcast %66 : vector<1x128xf32> to vector<2x128xf32>
    %70 = arith.addf %68, %69 : vector<2x128xf32>
    %cst_36 = arith.constant 0.000000e+00 : f32
    %71 = vector.broadcast %cst_36 : f32 to vector<2x128xf32>
    %72 = arith.maximumf %70, %71 : vector<2x128xf32>
    %c1024 = arith.constant 1024 : index
    %c0_37 = arith.constant 0 : index
    %73 = vector.load %arg2[%c1024, %c0_37] : memref<1152x128xbf16, #tpu.memory_space<vmem>>, vector<128x128xbf16>
    %c8 = arith.constant 8 : index
    %c0_38 = arith.constant 0 : index
    %74 = vector.load %arg3[%c8, %c0_38] : memref<9x128xf32, #tpu.memory_space<vmem>>, vector<1x128xf32>
    %75 = arith.truncf %72 : vector<2x128xf32> to vector<2x128xbf16>
    %cst_39 = arith.constant dense<0.000000e+00> : vector<2x128xf32>
    %76 = tpu.matmul %75, %73, %cst_39 {dimension_numbers = #tpu.dot_dimension_numbers<[1], [0], [0], [1], [0, 0, 1, 1], [], []>} : vector<2x128xbf16>, vector<128x128xbf16>, vector<2x128xf32> -> vector<2x128xf32>
    %77 = vector.broadcast %74 : vector<1x128xf32> to vector<2x128xf32>
    %78 = arith.addf %76, %77 : vector<2x128xf32>
    %79 = vector.extract_strided_slice %78 {offsets = [0, 0], sizes = [2, 16], strides = [1, 1]} : vector<2x128xf32> to vector<2x16xf32>
    %80 = vector.extract_strided_slice %78 {offsets = [0, 16], sizes = [2, 16], strides = [1, 1]} : vector<2x128xf32> to vector<2x16xf32>
    %81 = vector.extract_strided_slice %78 {offsets = [0, 32], sizes = [2, 16], strides = [1, 1]} : vector<2x128xf32> to vector<2x16xf32>
    %82 = vector.extract_strided_slice %78 {offsets = [0, 48], sizes = [2, 16], strides = [1, 1]} : vector<2x128xf32> to vector<2x16xf32>
    %83 = arith.maximumf %79, %80 : vector<2x16xf32>
    %84 = arith.maximumf %83, %81 : vector<2x16xf32>
    %85 = arith.maximumf %84, %82 : vector<2x16xf32>
    %86 = arith.subf %79, %85 : vector<2x16xf32>
    %87 = math.exp %86 : vector<2x16xf32>
    %88 = arith.subf %80, %85 : vector<2x16xf32>
    %89 = math.exp %88 : vector<2x16xf32>
    %90 = arith.subf %81, %85 : vector<2x16xf32>
    %91 = math.exp %90 : vector<2x16xf32>
    %92 = arith.subf %82, %85 : vector<2x16xf32>
    %93 = math.exp %92 : vector<2x16xf32>
    %94 = arith.addf %87, %89 : vector<2x16xf32>
    %95 = arith.addf %94, %91 : vector<2x16xf32>
    %96 = arith.addf %95, %93 : vector<2x16xf32>
    %97 = tpu.reciprocal %96 : vector<2x16xf32> -> vector<2x16xf32>
    %98 = arith.mulf %87, %97 : vector<2x16xf32>
    %c0_40 = arith.constant 0 : index
    %c0_41 = arith.constant 0 : index
    %99 = vector.load %arg4[%c0_40, %c0_41] : memref<2x128xf32, #tpu.memory_space<vmem>>, vector<2x16xf32>
    tpu.vector_store %arg4[%c0_40, %c0_41], %98 {strides = array<i32>} : memref<2x128xf32, #tpu.memory_space<vmem>>, vector<2x16xf32>,
    %100 = arith.mulf %89, %97 : vector<2x16xf32>
    %c0_42 = arith.constant 0 : index
    %c16 = arith.constant 16 : index
    %101 = vector.load %arg4[%c0_42, %c16] : memref<2x128xf32, #tpu.memory_space<vmem>>, vector<2x16xf32>
    tpu.vector_store %arg4[%c0_42, %c16], %100 {strides = array<i32>} : memref<2x128xf32, #tpu.memory_space<vmem>>, vector<2x16xf32>,
    %102 = arith.mulf %91, %97 : vector<2x16xf32>
    %c0_43 = arith.constant 0 : index
    %c32 = arith.constant 32 : index
    %103 = vector.load %arg4[%c0_43, %c32] : memref<2x128xf32, #tpu.memory_space<vmem>>, vector<2x16xf32>
    tpu.vector_store %arg4[%c0_43, %c32], %102 {strides = array<i32>} : memref<2x128xf32, #tpu.memory_space<vmem>>, vector<2x16xf32>,
    %104 = arith.mulf %93, %97 : vector<2x16xf32>
    %c0_44 = arith.constant 0 : index
    %c48 = arith.constant 48 : index
    %105 = vector.load %arg4[%c0_44, %c48] : memref<2x128xf32, #tpu.memory_space<vmem>>, vector<2x16xf32>
    tpu.vector_store %arg4[%c0_44, %c48], %104 {strides = array<i32>} : memref<2x128xf32, #tpu.memory_space<vmem>>, vector<2x16xf32>,
    %c0_45 = arith.constant 0 : index
    %c64 = arith.constant 64 : index
    %106 = vector.load %arg4[%c0_45, %c64] : memref<2x128xf32, #tpu.memory_space<vmem>>, vector<2x16xf32>
    tpu.vector_store %arg4[%c0_45, %c64], %33 {strides = array<i32>} : memref<2x128xf32, #tpu.memory_space<vmem>>, vector<2x16xf32>,
    %c0_46 = arith.constant 0 : index
    %c80 = arith.constant 80 : index
    %107 = vector.load %arg4[%c0_46, %c80] : memref<2x128xf32, #tpu.memory_space<vmem>>, vector<2x16xf32>
    tpu.vector_store %arg4[%c0_46, %c80], %34 {strides = array<i32>} : memref<2x128xf32, #tpu.memory_space<vmem>>, vector<2x16xf32>,
    %cst_47 = arith.constant 0.000000e+00 : f32
    %108 = vector.broadcast %cst_47 : f32 to vector<2x32xf32>
    %c0_48 = arith.constant 0 : index
    %c96 = arith.constant 96 : index
    %109 = vector.load %arg4[%c0_48, %c96] : memref<2x128xf32, #tpu.memory_space<vmem>>, vector<2x32xf32>
    tpu.vector_store %arg4[%c0_48, %c96], %108 {strides = array<i32>} : memref<2x128xf32, #tpu.memory_space<vmem>>, vector<2x32xf32>,
    return
  }
}

</mosaic_0001>

<llo_original>
// kernel: fused_forward.1
$region0: #{fused_forward.1}
  #allocation0 [shape = 'u32[]', space=smem, size = 0x4, offset = 0x4, fixed_abs, tag = 'smem constant byte address 0x4 - core index']
  #allocation1 [shape = 'u32[144,128]{1,0:T(1,128)}', space=vmem, size = 0x12000, scoped, tag = 'internal scratch']
  %s0 = inlined_call_operand.vmem [shape: f32[2,64], index: 0, kind: input, shape index: {}]
  %s1 = inlined_call_operand.vmem [shape: f32[2,16], index: 1, kind: input, shape index: {}]
  %s2 = inlined_call_operand.hbm [shape: bf16[1152,128], index: 2, kind: input, shape index: {}]
  %s3 = inlined_call_operand.hbm [shape: f32[9,128], index: 3, kind: input, shape index: {}]
  %s4 = inlined_call_operand.vmem [shape: f32[2,128], index: 4, kind: output, shape index: {}]
  %s5 = sld [smem:[#allocation0]]
  $region34: #{fused_forward.1} parent=0
    _
  %s7 = ssub.s32 1, %s5
  %s8 = scalar_select 0, %s7, %s5
  $region1: #{fused_forward.1} parent=0
    #allocation2 [shape = 'u8[294912]{0}', space=vmem, size = 0x48000, scoped, tag = 'input window, operand 2, single buffered']
    #allocation3 [shape = 's32[1]{0}', space=sflag, size = 0x4, scoped, tag = 'scoped memory for fused_forward.1']
    #allocation4 [shape = 'u8[8192]{0}', space=vmem, size = 0x2000, scoped, tag = 'input window, operand 3, single buffered']
    #allocation5 [shape = 's32[1]{0}', space=sflag, size = 0x4, scoped, tag = 'scoped memory for fused_forward.1']
    %9 = vsyncpa [#allocation3], 0
    %10 = vsyncpa [#allocation5], 0
    // Predicated region
    $region2: #{fused_forward.1} parent=1 // pred_check
      _
    $region3: #{fused_forward.1} parent=1 // pred_check_branch
      %12 = sbr.rel (0) target = $region5
    $region4: #{fused_forward.1} parent=1 // pred_region
      _
    $region5: #{fused_forward.1} parent=1 // pred_fallthru
      _
    // Predicated region
    $region6: #{fused_forward.1} parent=1 // pred_check
      _
    $region7: #{fused_forward.1} parent=1 // pred_check_branch
      %14 = sbr.rel (0) target = $region9
    $region8: #{fused_forward.1} parent=1 // pred_region
      _
    $region9: #{fused_forward.1} parent=1 // pred_fallthru
      _
    // Predicated region
    $region10: #{fused_forward.1} parent=1 // pred_check
      _
    $region11: #{fused_forward.1} parent=1 // pred_check_branch
      %16 = sbr.rel (0) target = $region13
    $region12: #{fused_forward.1} parent=1 // pred_region
      %s18 = ssub.s32 9216, 9216
      %19 = vsyncadd [#allocation3], %s18
      %s20 = sshll.u32 [#allocation2], 4
      %s21 = int_to_ptr.vmem [resolvable:$true] %s20
      %26 = dma.hbm_to_vmem [thread:$0]  %s2, 9216, %s21, [#allocation3], 64, 64, 4
    $region13: #{fused_forward.1} parent=1 // pred_fallthru
      _
    // Predicated region
    $region14: #{fused_forward.1} parent=1 // pred_check
      _
    $region15: #{fused_forward.1} parent=1 // pred_check_branch
      %28 = sbr.rel (0) target = $region17
    $region16: #{fused_forward.1} parent=1 // pred_region
      %s30 = ssub.s32 256, 256
      %31 = vsyncadd [#allocation5], %s30
      %s32 = sshll.u32 [#allocation4], 4
      %s33 = int_to_ptr.vmem [resolvable:$true] %s32
      %38 = dma.hbm_to_vmem [thread:$0]  %s3, 256, %s33, [#allocation5], 128, 128, 8
    $region17: #{fused_forward.1} parent=1 // pred_fallthru
      _
    // Predicated region
    $region18: #{fused_forward.1} parent=1 // pred_check
      _
    $region19: #{fused_forward.1} parent=1 // pred_check_branch
      %40 = sbr.rel (0) target = $region21
    $region20: #{fused_forward.1} parent=1 // pred_region
      %41 = dma.done [#allocation3], 9216
    $region21: #{fused_forward.1} parent=1 // pred_fallthru
      _
    // Predicated region
    $region22: #{fused_forward.1} parent=1 // pred_check
      _
    $region23: #{fused_forward.1} parent=1 // pred_check_branch
      %43 = sbr.rel (0) target = $region25
    $region24: #{fused_forward.1} parent=1 // pred_region
      %44 = dma.done [#allocation5], 256
    $region25: #{fused_forward.1} parent=1 // pred_fallthru
      _
    %v46 = vld [vmem:[%s0] sm:$0x3]
    %v47 = vld [vmem:[#allocation2] sm:$0xf]
    %v48 = vld [vmem:[#allocation2 + $0x4] sm:$0xf]
    %v49 = vld [vmem:[#allocation2 + $0x8] sm:$0xf]
    %v50 = vld [vmem:[#allocation2 + $0xc] sm:$0xf]
    %v51 = vld [vmem:[#allocation2 + $0x10] sm:$0xf]
    %v52 = vld [vmem:[#allocation2 + $0x14] sm:$0xf]
    %v53 = vld [vmem:[#allocation2 + $0x18] sm:$0xf]
    %v54 = vld [vmem:[#allocation2 + $0x1c] sm:$0xf]
    %v55 = vld [vmem:[#allocation4] sm:$0x1]
    %v56 = vpack.c.bf16 %v46, %v46
    %v57 = vlaneseq
    %v58 = vshrl.u32 %v57, 7
    %v59 = vsub.s32 0, %v58
    %v60 = vrot.slane %v55, %v59
    %v69 = vunpack.c.l.b16 %v47
    %v70 = vunpack.c.l.b16 %v48
    %v71 = vunpack.c.l.b16 %v49
    %v72 = vunpack.c.l.b16 %v50
    %v73 = vunpack.c.l.b16 %v51
    %v74 = vunpack.c.l.b16 %v52
    %v75 = vunpack.c.l.b16 %v53
    %v76 = vunpack.c.l.b16 %v54
    %v77 = vpack.c.b16 %v70, %v69
    %v78 = vpack.c.b16 %v72, %v71
    %v79 = vpack.c.b16 %v74, %v73
    %v80 = vpack.c.b16 %v76, %v75
    %vm85 = vcmask 523264
    %v87 = vsel %vm85, %v56, 0
    %89 = vmatprep.subr.bf16.mxu0 0
    %90 = vmatpush1.bf16.msra.mxu0 %v77
    %91 = vmatprep.subr.bf16.mxu0 0
    %92 = vmatpush1.bf16.msra.mxu0 %v78
    %93 = vmatprep.subr.bf16.mxu0 0
    %94 = vmatpush1.bf16.msra.mxu0 %v79
    %95 = vmatprep.subr.bf16.mxu0 0
    %96 = vmatpush1.bf16.msra.mxu0 %v80
    %97 = vmatprep.subr.bf16.mxu0 0
    %98 = vmatpush1.bf16.msra.mxu0 0
    %99 = vmatprep.subr.bf16.mxu0 0
    %100 = vmatpush1.bf16.msra.mxu0 0
    %101 = vmatprep.subr.bf16.mxu0 0
    %102 = vmatpush1.bf16.msra.mxu0 0
    %103 = vmatprep.subr.bf16.mxu0 0
    %104 = vmatpush1.bf16.msra.mxu0 0
    %105 = vmatprep.subr.bf16.mxu0 0
    %106 = vmatpush1.bf16.msra.mxu0 0
    %107 = vmatprep.subr.bf16.mxu0 0
    %108 = vmatpush1.bf16.msra.mxu0 0
    %109 = vmatprep.subr.bf16.mxu0 0
    %110 = vmatpush1.bf16.msra.mxu0 0
    %111 = vmatprep.subr.bf16.mxu0 0
    %112 = vmatpush1.bf16.msra.mxu0 0
    %113 = vmatprep.subr.bf16.mxu0 0
    %114 = vmatpush1.bf16.msra.mxu0 0
    %115 = vmatprep.subr.bf16.mxu0 0
    %116 = vmatpush1.bf16.msra.mxu0 0
    %117 = vmatprep.subr.bf16.mxu0 0
    %118 = vmatpush1.bf16.msra.mxu0 0
    %119 = vmatprep.subr.bf16.mxu0 0
    %120 = vmatpush1.bf16.msra.mxu0 0
    %121 = vmatprep.mubr.bf16.mxu0 0
    %122 = vmatmul.mubr.bf16.gmra.mrb[0].mxu0 %v87
    %v123 = vpop.f32.mrb[0].mxu0
    %v124 = vadd.f32 %v60, %v123
    %v125 = vpop.f32.mrb[0].mxu0
    %v126 = vpop.f32.mrb[0].mxu0
    %v127 = vpop.f32.mrb[0].mxu0
    %128 = vdwg.mxu0
    %v129 = vmax.f32 %v124, 0.0
    %v130 = vld [vmem:[#allocation2 + $0x40] sm:$0xf]
    %v131 = vld [vmem:[#allocation2 + $0x44] sm:$0xf]
    %v132 = vld [vmem:[#allocation2 + $0x48] sm:$0xf]
    %v133 = vld [vmem:[#allocation2 + $0x4c] sm:$0xf]
    %v134 = vld [vmem:[#allocation2 + $0x50] sm:$0xf]
    %v135 = vld [vmem:[#allocation2 + $0x54] sm:$0xf]
    %v136 = vld [vmem:[#allocation2 + $0x58] sm:$0xf]
    %v137 = vld [vmem:[#allocation2 + $0x5c] sm:$0xf]
    %v138 = vld [vmem:[#allocation2 + $0x60] sm:$0xf]
    %v139 = vld [vmem:[#allocation2 + $0x64] sm:$0xf]
    %v140 = vld [vmem:[#allocation2 + $0x68] sm:$0xf]
    %v141 = vld [vmem:[#allocation2 + $0x6c] sm:$0xf]
    %v142 = vld [vmem:[#allocation2 + $0x70] sm:$0xf]
    %v143 = vld [vmem:[#allocation2 + $0x74] sm:$0xf]
    %v144 = vld [vmem:[#allocation2 + $0x78] sm:$0xf]
    %v145 = vld [vmem:[#allocation2 + $0x7c] sm:$0xf]
    %v146 = vld [vmem:[#allocation4 + $0x1] sm:$0x1]
    %v147 = vpack.c.bf16 %v129, %v129
    %v148 = vlaneseq
    %v149 = vshrl.u32 %v148, 7
    %v150 = vsub.s32 0, %v149
    %v151 = vrot.slane %v146, %v150
    %v168 = vunpack.c.l.b16 %v130
    %v169 = vunpack.c.l.b16 %v131
    %v170 = vunpack.c.l.b16 %v132
    %v171 = vunpack.c.l.b16 %v133
    %v172 = vunpack.c.l.b16 %v134
    %v173 = vunpack.c.l.b16 %v135
    %v174 = vunpack.c.l.b16 %v136
    %v175 = vunpack.c.l.b16 %v137
    %v176 = vunpack.c.l.b16 %v138
    %v177 = vunpack.c.l.b16 %v139
    %v178 = vunpack.c.l.b16 %v140
    %v179 = vunpack.c.l.b16 %v141
    %v180 = vunpack.c.l.b16 %v142
    %v181 = vunpack.c.l.b16 %v143
    %v182 = vunpack.c.l.b16 %v144
    %v183 = vunpack.c.l.b16 %v145
    %v184 = vpack.c.b16 %v169, %v168
    %v185 = vpack.c.b16 %v171, %v170
    %v186 = vpack.c.b16 %v173, %v172
    %v187 = vpack.c.b16 %v175, %v174
    %v188 = vpack.c.b16 %v177, %v176
    %v189 = vpack.c.b16 %v179, %v178
    %v190 = vpack.c.b16 %v181, %v180
    %v191 = vpack.c.b16 %v183, %v182
    %200 = vmatprep.subr.bf16.mxu0 0
    %201 = vmatpush1.bf16.msra.mxu0 %v184
    %202 = vmatprep.subr.bf16.mxu0 0
    %203 = vmatpush1.bf16.msra.mxu0 %v185
    %204 = vmatprep.subr.bf16.mxu0 0
    %205 = vmatpush1.bf16.msra.mxu0 %v186
    %206 = vmatprep.subr.bf16.mxu0 0
    %207 = vmatpush1.bf16.msra.mxu0 %v187
    %208 = vmatprep.subr.bf16.mxu0 0
    %209 = vmatpush1.bf16.msra.mxu0 %v188
    %210 = vmatprep.subr.bf16.mxu0 0
    %211 = vmatpush1.bf16.msra.mxu0 %v189
    %212 = vmatprep.subr.bf16.mxu0 0
    %213 = vmatpush1.bf16.msra.mxu0 %v190
    %214 = vmatprep.subr.bf16.mxu0 0
    %215 = vmatpush1.bf16.msra.mxu0 %v191
    %216 = vmatprep.subr.bf16.mxu0 0
    %217 = vmatpush1.bf16.msra.mxu0 0
    %218 = vmatprep.subr.bf16.mxu0 0
    %219 = vmatpush1.bf16.msra.mxu0 0
    %220 = vmatprep.subr.bf16.mxu0 0
    %221 = vmatpush1.bf16.msra.mxu0 0
    %222 = vmatprep.subr.bf16.mxu0 0
    %223 = vmatpush1.bf16.msra.mxu0 0
    %224 = vmatprep.subr.bf16.mxu0 0
    %225 = vmatpush1.bf16.msra.mxu0 0
    %226 = vmatprep.subr.bf16.mxu0 0
    %227 = vmatpush1.bf16.msra.mxu0 0
    %228 = vmatprep.subr.bf16.mxu0 0
    %229 = vmatpush1.bf16.msra.mxu0 0
    %230 = vmatprep.subr.bf16.mxu0 0
    %231 = vmatpush1.bf16.msra.mxu0 0
    %232 = vmatprep.mubr.bf16.mxu0 0
    %233 = vmatmul.mubr.bf16.gmra.mrb[0].mxu0 %v147
    %v234 = vpop.f32.mrb[0].mxu0
    %v235 = vadd.f32 %v151, %v234
    %v236 = vpop.f32.mrb[0].mxu0
    %v237 = vpop.f32.mrb[0].mxu0
    %v238 = vpop.f32.mrb[0].mxu0
    %239 = vdwg.mxu0
    %v240 = vmax.f32 %v235, 0.0
    %v241 = vld [vmem:[#allocation2 + $0x80] sm:$0xf]
    %v242 = vld [vmem:[#allocation2 + $0x84] sm:$0xf]
    %v243 = vld [vmem:[#allocation2 + $0x88] sm:$0xf]
    %v244 = vld [vmem:[#allocation2 + $0x8c] sm:$0xf]
    %v245 = vld [vmem:[#allocation2 + $0x90] sm:$0xf]
    %v246 = vld [vmem:[#allocation2 + $0x94] sm:$0xf]
    %v247 = vld [vmem:[#allocation2 + $0x98] sm:$0xf]
    %v248 = vld [vmem:[#allocation2 + $0x9c] sm:$0xf]
    %v249 = vld [vmem:[#allocation2 + $0xa0] sm:$0xf]
    %v250 = vld [vmem:[#allocation2 + $0xa4] sm:$0xf]
    %v251 = vld [vmem:[#allocation2 + $0xa8] sm:$0xf]
    %v252 = vld [vmem:[#allocation2 + $0xac] sm:$0xf]
    %v253 = vld [vmem:[#allocation2 + $0xb0] sm:$0xf]
    %v254 = vld [vmem:[#allocation2 + $0xb4] sm:$0xf]
    %v255 = vld [vmem:[#allocation2 + $0xb8] sm:$0xf]
    %v256 = vld [vmem:[#allocation2 + $0xbc] sm:$0xf]
    %v257 = vld [vmem:[#allocation4 + $0x2] sm:$0x1]
    %v258 = vpack.c.bf16 %v240, %v240
    %v259 = vlaneseq
    %v260 = vshrl.u32 %v259, 7
    %v261 = vsub.s32 0, %v260
    %v262 = vrot.slane %v257, %v261
    %v279 = vunpack.c.l.b16 %v241
    %v280 = vunpack.c.l.b16 %v242
    %v281 = vunpack.c.l.b16 %v243
    %v282 = vunpack.c.l.b16 %v244
    %v283 = vunpack.c.l.b16 %v245
    %v284 = vunpack.c.l.b16 %v246
    %v285 = vunpack.c.l.b16 %v247
    %v286 = vunpack.c.l.b16 %v248
    %v287 = vunpack.c.l.b16 %v249
    %v288 = vunpack.c.l.b16 %v250
    %v289 = vunpack.c.l.b16 %v251
    %v290 = vunpack.c.l.b16 %v252
    %v291 = vunpack.c.l.b16 %v253
    %v292 = vunpack.c.l.b16 %v254
    %v293 = vunpack.c.l.b16 %v255
    %v294 = vunpack.c.l.b16 %v256
    %v295 = vpack.c.b16 %v280, %v279
    %v296 = vpack.c.b16 %v282, %v281
    %v297 = vpack.c.b16 %v284, %v283
    %v298 = vpack.c.b16 %v286, %v285
    %v299 = vpack.c.b16 %v288, %v287
    %v300 = vpack.c.b16 %v290, %v289
    %v301 = vpack.c.b16 %v292, %v291
    %v302 = vpack.c.b16 %v294, %v293
    %311 = vmatprep.subr.bf16.mxu0 0
    %312 = vmatpush1.bf16.msra.mxu0 %v295
    %313 = vmatprep.subr.bf16.mxu0 0
    %314 = vmatpush1.bf16.msra.mxu0 %v296
    %315 = vmatprep.subr.bf16.mxu0 0
    %316 = vmatpush1.bf16.msra.mxu0 %v297
    %317 = vmatprep.subr.bf16.mxu0 0
    %318 = vmatpush1.bf16.msra.mxu0 %v298
    %319 = vmatprep.subr.bf16.mxu0 0
    %320 = vmatpush1.bf16.msra.mxu0 %v299
    %321 = vmatprep.subr.bf16.mxu0 0
    %322 = vmatpush1.bf16.msra.mxu0 %v300
    %323 = vmatprep.subr.bf16.mxu0 0
    %324 = vmatpush1.bf16.msra.mxu0 %v301
    %325 = vmatprep.subr.bf16.mxu0 0
    %326 = vmatpush1.bf16.msra.mxu0 %v302
    %327 = vmatprep.subr.bf16.mxu0 0
    %328 = vmatpush1.bf16.msra.mxu0 0
    %329 = vmatprep.subr.bf16.mxu0 0
    %330 = vmatpush1.bf16.msra.mxu0 0
    %331 = vmatprep.subr.bf16.mxu0 0
    %332 = vmatpush1.bf16.msra.mxu0 0
    %333 = vmatprep.subr.bf16.mxu0 0
    %334 = vmatpush1.bf16.msra.mxu0 0
    %335 = vmatprep.subr.bf16.mxu0 0
    %336 = vmatpush1.bf16.msra.mxu0 0
    %337 = vmatprep.subr.bf16.mxu0 0
    %338 = vmatpush1.bf16.msra.mxu0 0
    %339 = vmatprep.subr.bf16.mxu0 0
    %340 = vmatpush1.bf16.msra.mxu0 0
    %341 = vmatprep.subr.bf16.mxu0 0
    %342 = vmatpush1.bf16.msra.mxu0 0
    %343 = vmatprep.mubr.bf16.mxu0 0
    %344 = vmatmul.mubr.bf16.gmra.mrb[0].mxu0 %v258
    %v345 = vpop.f32.mrb[0].mxu0
    %v346 = vadd.f32 %v262, %v345
    %v347 = vpop.f32.mrb[0].mxu0
    %v348 = vpop.f32.mrb[0].mxu0
    %v349 = vpop.f32.mrb[0].mxu0
    %350 = vdwg.mxu0
    %v351 = vmax.f32 %v346, 0.0
    %v352 = vld [vmem:[#allocation2 + $0xc0] sm:$0xf]
    %v353 = vld [vmem:[#allocation2 + $0xc4] sm:$0xf]
    %v354 = vld [vmem:[#allocation2 + $0xc8] sm:$0xf]
    %v355 = vld [vmem:[#allocation2 + $0xcc] sm:$0xf]
    %v356 = vld [vmem:[#allocation2 + $0xd0] sm:$0xf]
    %v357 = vld [vmem:[#allocation2 + $0xd4] sm:$0xf]
    %v358 = vld [vmem:[#allocation2 + $0xd8] sm:$0xf]
    %v359 = vld [vmem:[#allocation2 + $0xdc] sm:$0xf]
    %v360 = vld [vmem:[#allocation2 + $0xe0] sm:$0xf]
    %v361 = vld [vmem:[#allocation2 + $0xe4] sm:$0xf]
    %v362 = vld [vmem:[#allocation2 + $0xe8] sm:$0xf]
    %v363 = vld [vmem:[#allocation2 + $0xec] sm:$0xf]
    %v364 = vld [vmem:[#allocation2 + $0xf0] sm:$0xf]
    %v365 = vld [vmem:[#allocation2 + $0xf4] sm:$0xf]
    %v366 = vld [vmem:[#allocation2 + $0xf8] sm:$0xf]
    %v367 = vld [vmem:[#allocation2 + $0xfc] sm:$0xf]
    %v368 = vld [vmem:[#allocation4 + $0x3] sm:$0x1]
    %v369 = vpack.c.bf16 %v351, %v351
    %v370 = vlaneseq
    %v371 = vshrl.u32 %v370, 7
    %v372 = vsub.s32 0, %v371
    %v373 = vrot.slane %v368, %v372
    %v390 = vunpack.c.l.b16 %v352
    %v391 = vunpack.c.l.b16 %v353
    %v392 = vunpack.c.l.b16 %v354
    %v393 = vunpack.c.l.b16 %v355
    %v394 = vunpack.c.l.b16 %v356
    %v395 = vunpack.c.l.b16 %v357
    %v396 = vunpack.c.l.b16 %v358
    %v397 = vunpack.c.l.b16 %v359
    %v398 = vunpack.c.l.b16 %v360
    %v399 = vunpack.c.l.b16 %v361
    %v400 = vunpack.c.l.b16 %v362
    %v401 = vunpack.c.l.b16 %v363
    %v402 = vunpack.c.l.b16 %v364
    %v403 = vunpack.c.l.b16 %v365
    %v404 = vunpack.c.l.b16 %v366
    %v405 = vunpack.c.l.b16 %v367
    %v406 = vpack.c.b16 %v391, %v390
    %v407 = vpack.c.b16 %v393, %v392
    %v408 = vpack.c.b16 %v395, %v394
    %v409 = vpack.c.b16 %v397, %v396
    %v410 = vpack.c.b16 %v399, %v398
    %v411 = vpack.c.b16 %v401, %v400
    %v412 = vpack.c.b16 %v403, %v402
    %v413 = vpack.c.b16 %v405, %v404
    %422 = vmatprep.subr.bf16.mxu0 0
    %423 = vmatpush1.bf16.msra.mxu0 %v406
    %424 = vmatprep.subr.bf16.mxu0 0
    %425 = vmatpush1.bf16.msra.mxu0 %v407
    %426 = vmatprep.subr.bf16.mxu0 0
    %427 = vmatpush1.bf16.msra.mxu0 %v408
    %428 = vmatprep.subr.bf16.mxu0 0
    %429 = vmatpush1.bf16.msra.mxu0 %v409
    %430 = vmatprep.subr.bf16.mxu0 0
    %431 = vmatpush1.bf16.msra.mxu0 %v410
    %432 = vmatprep.subr.bf16.mxu0 0
    %433 = vmatpush1.bf16.msra.mxu0 %v411
    %434 = vmatprep.subr.bf16.mxu0 0
    %435 = vmatpush1.bf16.msra.mxu0 %v412
    %436 = vmatprep.subr.bf16.mxu0 0
    %437 = vmatpush1.bf16.msra.mxu0 %v413
    %438 = vmatprep.subr.bf16.mxu0 0
    %439 = vmatpush1.bf16.msra.mxu0 0
    %440 = vmatprep.subr.bf16.mxu0 0
    %441 = vmatpush1.bf16.msra.mxu0 0
    %442 = vmatprep.subr.bf16.mxu0 0
    %443 = vmatpush1.bf16.msra.mxu0 0
    %444 = vmatprep.subr.bf16.mxu0 0
    %445 = vmatpush1.bf16.msra.mxu0 0
    %446 = vmatprep.subr.bf16.mxu0 0
    %447 = vmatpush1.bf16.msra.mxu0 0
    %448 = vmatprep.subr.bf16.mxu0 0
    %449 = vmatpush1.bf16.msra.mxu0 0
    %450 = vmatprep.subr.bf16.mxu0 0
    %451 = vmatpush1.bf16.msra.mxu0 0
    %452 = vmatprep.subr.bf16.mxu0 0
    %453 = vmatpush1.bf16.msra.mxu0 0
    %454 = vmatprep.mubr.bf16.mxu0 0
    %455 = vmatmul.mubr.bf16.gmra.mrb[0].mxu0 %v369
    %v456 = vpop.f32.mrb[0].mxu0
    %v457 = vadd.f32 %v373, %v456
    %v458 = vpop.f32.mrb[0].mxu0
    %v459 = vpop.f32.mrb[0].mxu0
    %v460 = vpop.f32.mrb[0].mxu0
    %461 = vdwg.mxu0
    %v462 = vmax.f32 %v457, 0.0
    %v463 = vld [vmem:[%s1] sm:$0x3]
    %v464 = vmul.f32 %v457, 0.5
    %v465 = vmul.f32 %v464, 1.442695
    %v466 = vpow.pop %v465
    %468 = vrot.lane.b32.xlu0 %v466, 112
    %v469 = vpop.permute.xlu0 %468
    %v471 = vmul.f32 %v463, %v469
    %v472 = vadd.f32 %v471, %v462
    %v473 = vld [vmem:[#allocation2 + $0x100] sm:$0xf]
    %v474 = vld [vmem:[#allocation2 + $0x104] sm:$0xf]
    %v475 = vld [vmem:[#allocation4 + $0x4] sm:$0x1]
    %v476 = vpack.c.bf16 %v472, %v472
    %v477 = vlaneseq
    %v478 = vshrl.u32 %v477, 7
    %v479 = vsub.s32 0, %v478
    %v480 = vrot.slane %v475, %v479
    %v483 = vunpack.c.l.b16 %v473
    %v484 = vunpack.c.l.b16 %v474
    %v485 = vpack.c.b16 %v484, %v483
    %vm487 = vcmask 130048
    %v489 = vsel %vm487, %v476, 0
    %491 = vmatprep.subr.bf16.mxu0 0
    %492 = vmatpush1.bf16.msra.mxu0 %v485
    %493 = vmatprep.subr.bf16.mxu0 0
    %494 = vmatpush1.bf16.msra.mxu0 0
    %495 = vmatprep.subr.bf16.mxu0 0
    %496 = vmatpush1.bf16.msra.mxu0 0
    %497 = vmatprep.subr.bf16.mxu0 0
    %498 = vmatpush1.bf16.msra.mxu0 0
    %499 = vmatprep.subr.bf16.mxu0 0
    %500 = vmatpush1.bf16.msra.mxu0 0
    %501 = vmatprep.subr.bf16.mxu0 0
    %502 = vmatpush1.bf16.msra.mxu0 0
    %503 = vmatprep.subr.bf16.mxu0 0
    %504 = vmatpush1.bf16.msra.mxu0 0
    %505 = vmatprep.subr.bf16.mxu0 0
    %506 = vmatpush1.bf16.msra.mxu0 0
    %507 = vmatprep.subr.bf16.mxu0 0
    %508 = vmatpush1.bf16.msra.mxu0 0
    %509 = vmatprep.subr.bf16.mxu0 0
    %510 = vmatpush1.bf16.msra.mxu0 0
    %511 = vmatprep.subr.bf16.mxu0 0
    %512 = vmatpush1.bf16.msra.mxu0 0
    %513 = vmatprep.subr.bf16.mxu0 0
    %514 = vmatpush1.bf16.msra.mxu0 0
    %515 = vmatprep.subr.bf16.mxu0 0
    %516 = vmatpush1.bf16.msra.mxu0 0
    %517 = vmatprep.subr.bf16.mxu0 0
    %518 = vmatpush1.bf16.msra.mxu0 0
    %519 = vmatprep.subr.bf16.mxu0 0
    %520 = vmatpush1.bf16.msra.mxu0 0
    %521 = vmatprep.subr.bf16.mxu0 0
    %522 = vmatpush1.bf16.msra.mxu0 0
    %523 = vmatprep.mubr.bf16.mxu0 0
    %524 = vmatmul.mubr.bf16.gmra.mrb[0].mxu0 %v489
    %v525 = vpop.f32.mrb[0].mxu0
    %v526 = vadd.f32 %v480, %v525
    %v527 = vpop.f32.mrb[0].mxu0
    %v528 = vpop.f32.mrb[0].mxu0
    %v529 = vpop.f32.mrb[0].mxu0
    %530 = vdwg.mxu0
    %v531 = vmax.f32 %v526, 0.0
    %v532 = vld [vmem:[#allocation2 + $0x140] sm:$0xf]
    %v533 = vld [vmem:[#allocation2 + $0x144] sm:$0xf]
    %v534 = vld [vmem:[#allocation2 + $0x148] sm:$0xf]
    %v535 = vld [vmem:[#allocation2 + $0x14c] sm:$0xf]
    %v536 = vld [vmem:[#allocation2 + $0x150] sm:$0xf]
    %v537 = vld [vmem:[#allocation2 + $0x154] sm:$0xf]
    %v538 = vld [vmem:[#allocation2 + $0x158] sm:$0xf]
    %v539 = vld [vmem:[#allocation2 + $0x15c] sm:$0xf]
    %v540 = vld [vmem:[#allocation2 + $0x160] sm:$0xf]
    %v541 = vld [vmem:[#allocation2 + $0x164] sm:$0xf]
    %v542 = vld [vmem:[#allocation2 + $0x168] sm:$0xf]
    %v543 = vld [vmem:[#allocation2 + $0x16c] sm:$0xf]
    %v544 = vld [vmem:[#allocation2 + $0x170] sm:$0xf]
    %v545 = vld [vmem:[#allocation2 + $0x174] sm:$0xf]
    %v546 = vld [vmem:[#allocation2 + $0x178] sm:$0xf]
    %v547 = vld [vmem:[#allocation2 + $0x17c] sm:$0xf]
    %v548 = vld [vmem:[#allocation4 + $0x5] sm:$0x1]
    %v549 = vpack.c.bf16 %v531, %v531
    %v550 = vlaneseq
    %v551 = vshrl.u32 %v550, 7
    %v552 = vsub.s32 0, %v551
    %v553 = vrot.slane %v548, %v552
    %v570 = vunpack.c.l.b16 %v532
    %v571 = vunpack.c.l.b16 %v533
    %v572 = vunpack.c.l.b16 %v534
    %v573 = vunpack.c.l.b16 %v535
    %v574 = vunpack.c.l.b16 %v536
    %v575 = vunpack.c.l.b16 %v537
    %v576 = vunpack.c.l.b16 %v538
    %v577 = vunpack.c.l.b16 %v539
    %v578 = vunpack.c.l.b16 %v540
    %v579 = vunpack.c.l.b16 %v541
    %v580 = vunpack.c.l.b16 %v542
    %v581 = vunpack.c.l.b16 %v543
    %v582 = vunpack.c.l.b16 %v544
    %v583 = vunpack.c.l.b16 %v545
    %v584 = vunpack.c.l.b16 %v546
    %v585 = vunpack.c.l.b16 %v547
    %v586 = vpack.c.b16 %v571, %v570
    %v587 = vpack.c.b16 %v573, %v572
    %v588 = vpack.c.b16 %v575, %v574
    %v589 = vpack.c.b16 %v577, %v576
    %v590 = vpack.c.b16 %v579, %v578
    %v591 = vpack.c.b16 %v581, %v580
    %v592 = vpack.c.b16 %v583, %v582
    %v593 = vpack.c.b16 %v585, %v584
    %602 = vmatprep.subr.bf16.mxu0 0
    %603 = vmatpush1.bf16.msra.mxu0 %v586
    %604 = vmatprep.subr.bf16.mxu0 0
    %605 = vmatpush1.bf16.msra.mxu0 %v587
    %606 = vmatprep.subr.bf16.mxu0 0
    %607 = vmatpush1.bf16.msra.mxu0 %v588
    %608 = vmatprep.subr.bf16.mxu0 0
    %609 = vmatpush1.bf16.msra.mxu0 %v589
    %610 = vmatprep.subr.bf16.mxu0 0
    %611 = vmatpush1.bf16.msra.mxu0 %v590
    %612 = vmatprep.subr.bf16.mxu0 0
    %613 = vmatpush1.bf16.msra.mxu0 %v591
    %614 = vmatprep.subr.bf16.mxu0 0
    %615 = vmatpush1.bf16.msra.mxu0 %v592
    %616 = vmatprep.subr.bf16.mxu0 0
    %617 = vmatpush1.bf16.msra.mxu0 %v593
    %618 = vmatprep.subr.bf16.mxu0 0
    %619 = vmatpush1.bf16.msra.mxu0 0
    %620 = vmatprep.subr.bf16.mxu0 0
    %621 = vmatpush1.bf16.msra.mxu0 0
    %622 = vmatprep.subr.bf16.mxu0 0
    %623 = vmatpush1.bf16.msra.mxu0 0
    %624 = vmatprep.subr.bf16.mxu0 0
    %625 = vmatpush1.bf16.msra.mxu0 0
    %626 = vmatprep.subr.bf16.mxu0 0
    %627 = vmatpush1.bf16.msra.mxu0 0
    %628 = vmatprep.subr.bf16.mxu0 0
    %629 = vmatpush1.bf16.msra.mxu0 0
    %630 = vmatprep.subr.bf16.mxu0 0
    %631 = vmatpush1.bf16.msra.mxu0 0
    %632 = vmatprep.subr.bf16.mxu0 0
    %633 = vmatpush1.bf16.msra.mxu0 0
    %634 = vmatprep.mubr.bf16.mxu0 0
    %635 = vmatmul.mubr.bf16.gmra.mrb[0].mxu0 %v549
    %v636 = vpop.f32.mrb[0].mxu0
    %v637 = vadd.f32 %v553, %v636
    %v638 = vpop.f32.mrb[0].mxu0
    %v639 = vpop.f32.mrb[0].mxu0
    %v640 = vpop.f32.mrb[0].mxu0
    %641 = vdwg.mxu0
    %v642 = vmax.f32 %v637, 0.0
    %v643 = vld [vmem:[#allocation2 + $0x180] sm:$0xf]
    %v644 = vld [vmem:[#allocation2 + $0x184] sm:$0xf]
    %v645 = vld [vmem:[#allocation2 + $0x188] sm:$0xf]
    %v646 = vld [vmem:[#allocation2 + $0x18c] sm:$0xf]
    %v647 = vld [vmem:[#allocation2 + $0x190] sm:$0xf]
    %v648 = vld [vmem:[#allocation2 + $0x194] sm:$0xf]
    %v649 = vld [vmem:[#allocation2 + $0x198] sm:$0xf]
    %v650 = vld [vmem:[#allocation2 + $0x19c] sm:$0xf]
    %v651 = vld [vmem:[#allocation2 + $0x1a0] sm:$0xf]
    %v652 = vld [vmem:[#allocation2 + $0x1a4] sm:$0xf]
    %v653 = vld [vmem:[#allocation2 + $0x1a8] sm:$0xf]
    %v654 = vld [vmem:[#allocation2 + $0x1ac] sm:$0xf]
    %v655 = vld [vmem:[#allocation2 + $0x1b0] sm:$0xf]
    %v656 = vld [vmem:[#allocation2 + $0x1b4] sm:$0xf]
    %v657 = vld [vmem:[#allocation2 + $0x1b8] sm:$0xf]
    %v658 = vld [vmem:[#allocation2 + $0x1bc] sm:$0xf]
    %v659 = vld [vmem:[#allocation4 + $0x6] sm:$0x1]
    %v660 = vpack.c.bf16 %v642, %v642
    %v661 = vlaneseq
    %v662 = vshrl.u32 %v661, 7
    %v663 = vsub.s32 0, %v662
    %v664 = vrot.slane %v659, %v663
    %v681 = vunpack.c.l.b16 %v643
    %v682 = vunpack.c.l.b16 %v644
    %v683 = vunpack.c.l.b16 %v645
    %v684 = vunpack.c.l.b16 %v646
    %v685 = vunpack.c.l.b16 %v647
    %v686 = vunpack.c.l.b16 %v648
    %v687 = vunpack.c.l.b16 %v649
    %v688 = vunpack.c.l.b16 %v650
    %v689 = vunpack.c.l.b16 %v651
    %v690 = vunpack.c.l.b16 %v652
    %v691 = vunpack.c.l.b16 %v653
    %v692 = vunpack.c.l.b16 %v654
    %v693 = vunpack.c.l.b16 %v655
    %v694 = vunpack.c.l.b16 %v656
    %v695 = vunpack.c.l.b16 %v657
    %v696 = vunpack.c.l.b16 %v658
    %v697 = vpack.c.b16 %v682, %v681
    %v698 = vpack.c.b16 %v684, %v683
    %v699 = vpack.c.b16 %v686, %v685
    %v700 = vpack.c.b16 %v688, %v687
    %v701 = vpack.c.b16 %v690, %v689
    %v702 = vpack.c.b16 %v692, %v691
    %v703 = vpack.c.b16 %v694, %v693
    %v704 = vpack.c.b16 %v696, %v695
    %713 = vmatprep.subr.bf16.mxu0 0
    %714 = vmatpush1.bf16.msra.mxu0 %v697
    %715 = vmatprep.subr.bf16.mxu0 0
    %716 = vmatpush1.bf16.msra.mxu0 %v698
    %717 = vmatprep.subr.bf16.mxu0 0
    %718 = vmatpush1.bf16.msra.mxu0 %v699
    %719 = vmatprep.subr.bf16.mxu0 0
    %720 = vmatpush1.bf16.msra.mxu0 %v700
    %721 = vmatprep.subr.bf16.mxu0 0
    %722 = vmatpush1.bf16.msra.mxu0 %v701
    %723 = vmatprep.subr.bf16.mxu0 0
    %724 = vmatpush1.bf16.msra.mxu0 %v702
    %725 = vmatprep.subr.bf16.mxu0 0
    %726 = vmatpush1.bf16.msra.mxu0 %v703
    %727 = vmatprep.subr.bf16.mxu0 0
    %728 = vmatpush1.bf16.msra.mxu0 %v704
    %729 = vmatprep.subr.bf16.mxu0 0
    %730 = vmatpush1.bf16.msra.mxu0 0
    %731 = vmatprep.subr.bf16.mxu0 0
    %732 = vmatpush1.bf16.msra.mxu0 0
    %733 = vmatprep.subr.bf16.mxu0 0
    %734 = vmatpush1.bf16.msra.mxu0 0
    %735 = vmatprep.subr.bf16.mxu0 0
    %736 = vmatpush1.bf16.msra.mxu0 0
    %737 = vmatprep.subr.bf16.mxu0 0
    %738 = vmatpush1.bf16.msra.mxu0 0
    %739 = vmatprep.subr.bf16.mxu0 0
    %740 = vmatpush1.bf16.msra.mxu0 0
    %741 = vmatprep.subr.bf16.mxu0 0
    %742 = vmatpush1.bf16.msra.mxu0 0
    %743 = vmatprep.subr.bf16.mxu0 0
    %744 = vmatpush1.bf16.msra.mxu0 0
    %745 = vmatprep.mubr.bf16.mxu0 0
    %746 = vmatmul.mubr.bf16.gmra.mrb[0].mxu0 %v660
    %v747 = vpop.f32.mrb[0].mxu0
    %v748 = vadd.f32 %v664, %v747
    %v749 = vpop.f32.mrb[0].mxu0
    %v750 = vpop.f32.mrb[0].mxu0
    %v751 = vpop.f32.mrb[0].mxu0
    %752 = vdwg.mxu0
    %v753 = vmax.f32 %v748, 0.0
    %v754 = vld [vmem:[#allocation2 + $0x1c0] sm:$0xf]
    %v755 = vld [vmem:[#allocation2 + $0x1c4] sm:$0xf]
    %v756 = vld [vmem:[#allocation2 + $0x1c8] sm:$0xf]
    %v757 = vld [vmem:[#allocation2 + $0x1cc] sm:$0xf]
    %v758 = vld [vmem:[#allocation2 + $0x1d0] sm:$0xf]
    %v759 = vld [vmem:[#allocation2 + $0x1d4] sm:$0xf]
    %v760 = vld [vmem:[#allocation2 + $0x1d8] sm:$0xf]
    %v761 = vld [vmem:[#allocation2 + $0x1dc] sm:$0xf]
    %v762 = vld [vmem:[#allocation2 + $0x1e0] sm:$0xf]
    %v763 = vld [vmem:[#allocation2 + $0x1e4] sm:$0xf]
    %v764 = vld [vmem:[#allocation2 + $0x1e8] sm:$0xf]
    %v765 = vld [vmem:[#allocation2 + $0x1ec] sm:$0xf]
    %v766 = vld [vmem:[#allocation2 + $0x1f0] sm:$0xf]
    %v767 = vld [vmem:[#allocation2 + $0x1f4] sm:$0xf]
    %v768 = vld [vmem:[#allocation2 + $0x1f8] sm:$0xf]
    %v769 = vld [vmem:[#allocation2 + $0x1fc] sm:$0xf]
    %v770 = vld [vmem:[#allocation4 + $0x7] sm:$0x1]
    %v771 = vpack.c.bf16 %v753, %v753
    %v772 = vlaneseq
    %v773 = vshrl.u32 %v772, 7
    %v774 = vsub.s32 0, %v773
    %v775 = vrot.slane %v770, %v774
    %v792 = vunpack.c.l.b16 %v754
    %v793 = vunpack.c.l.b16 %v755
    %v794 = vunpack.c.l.b16 %v756
    %v795 = vunpack.c.l.b16 %v757
    %v796 = vunpack.c.l.b16 %v758
    %v797 = vunpack.c.l.b16 %v759
    %v798 = vunpack.c.l.b16 %v760
    %v799 = vunpack.c.l.b16 %v761
    %v800 = vunpack.c.l.b16 %v762
    %v801 = vunpack.c.l.b16 %v763
    %v802 = vunpack.c.l.b16 %v764
    %v803 = vunpack.c.l.b16 %v765
    %v804 = vunpack.c.l.b16 %v766
    %v805 = vunpack.c.l.b16 %v767
    %v806 = vunpack.c.l.b16 %v768
    %v807 = vunpack.c.l.b16 %v769
    %v808 = vpack.c.b16 %v793, %v792
    %v809 = vpack.c.b16 %v795, %v794
    %v810 = vpack.c.b16 %v797, %v796
    %v811 = vpack.c.b16 %v799, %v798
    %v812 = vpack.c.b16 %v801, %v800
    %v813 = vpack.c.b16 %v803, %v802
    %v814 = vpack.c.b16 %v805, %v804
    %v815 = vpack.c.b16 %v807, %v806
    %824 = vmatprep.subr.bf16.mxu0 0
    %825 = vmatpush1.bf16.msra.mxu0 %v808
    %826 = vmatprep.subr.bf16.mxu0 0
    %827 = vmatpush1.bf16.msra.mxu0 %v809
    %828 = vmatprep.subr.bf16.mxu0 0
    %829 = vmatpush1.bf16.msra.mxu0 %v810
    %830 = vmatprep.subr.bf16.mxu0 0
    %831 = vmatpush1.bf16.msra.mxu0 %v811
    %832 = vmatprep.subr.bf16.mxu0 0
    %833 = vmatpush1.bf16.msra.mxu0 %v812
    %834 = vmatprep.subr.bf16.mxu0 0
    %835 = vmatpush1.bf16.msra.mxu0 %v813
    %836 = vmatprep.subr.bf16.mxu0 0
    %837 = vmatpush1.bf16.msra.mxu0 %v814
    %838 = vmatprep.subr.bf16.mxu0 0
    %839 = vmatpush1.bf16.msra.mxu0 %v815
    %840 = vmatprep.subr.bf16.mxu0 0
    %841 = vmatpush1.bf16.msra.mxu0 0
    %842 = vmatprep.subr.bf16.mxu0 0
    %843 = vmatpush1.bf16.msra.mxu0 0
    %844 = vmatprep.subr.bf16.mxu0 0
    %845 = vmatpush1.bf16.msra.mxu0 0
    %846 = vmatprep.subr.bf16.mxu0 0
    %847 = vmatpush1.bf16.msra.mxu0 0
    %848 = vmatprep.subr.bf16.mxu0 0
    %849 = vmatpush1.bf16.msra.mxu0 0
    %850 = vmatprep.subr.bf16.mxu0 0
    %851 = vmatpush1.bf16.msra.mxu0 0
    %852 = vmatprep.subr.bf16.mxu0 0
    %853 = vmatpush1.bf16.msra.mxu0 0
    %854 = vmatprep.subr.bf16.mxu0 0
    %855 = vmatpush1.bf16.msra.mxu0 0
    %856 = vmatprep.mubr.bf16.mxu0 0
    %857 = vmatmul.mubr.bf16.gmra.mrb[0].mxu0 %v771
    %v858 = vpop.f32.mrb[0].mxu0
    %v859 = vadd.f32 %v775, %v858
    %v860 = vpop.f32.mrb[0].mxu0
    %v861 = vpop.f32.mrb[0].mxu0
    %v862 = vpop.f32.mrb[0].mxu0
    %863 = vdwg.mxu0
    %v864 = vmax.f32 %v859, 0.0
    %v865 = vld [vmem:[#allocation2 + $0x200] sm:$0xf]
    %v866 = vld [vmem:[#allocation2 + $0x204] sm:$0xf]
    %v867 = vld [vmem:[#allocation2 + $0x208] sm:$0xf]
    %v868 = vld [vmem:[#allocation2 + $0x20c] sm:$0xf]
    %v869 = vld [vmem:[#allocation2 + $0x210] sm:$0xf]
    %v870 = vld [vmem:[#allocation2 + $0x214] sm:$0xf]
    %v871 = vld [vmem:[#allocation2 + $0x218] sm:$0xf]
    %v872 = vld [vmem:[#allocation2 + $0x21c] sm:$0xf]
    %v873 = vld [vmem:[#allocation2 + $0x220] sm:$0xf]
    %v874 = vld [vmem:[#allocation2 + $0x224] sm:$0xf]
    %v875 = vld [vmem:[#allocation2 + $0x228] sm:$0xf]
    %v876 = vld [vmem:[#allocation2 + $0x22c] sm:$0xf]
    %v877 = vld [vmem:[#allocation2 + $0x230] sm:$0xf]
    %v878 = vld [vmem:[#allocation2 + $0x234] sm:$0xf]
    %v879 = vld [vmem:[#allocation2 + $0x238] sm:$0xf]
    %v880 = vld [vmem:[#allocation2 + $0x23c] sm:$0xf]
    %v881 = vld [vmem:[#allocation4 + $0x8] sm:$0x1]
    %v882 = vpack.c.bf16 %v864, %v864
    %v883 = vlaneseq
    %v884 = vshrl.u32 %v883, 7
    %v885 = vsub.s32 0, %v884
    %v886 = vrot.slane %v881, %v885
    %v903 = vunpack.c.l.b16 %v865
    %v904 = vunpack.c.l.b16 %v866
    %v905 = vunpack.c.l.b16 %v867
    %v906 = vunpack.c.l.b16 %v868
    %v907 = vunpack.c.l.b16 %v869
    %v908 = vunpack.c.l.b16 %v870
    %v909 = vunpack.c.l.b16 %v871
    %v910 = vunpack.c.l.b16 %v872
    %v911 = vunpack.c.l.b16 %v873
    %v912 = vunpack.c.l.b16 %v874
    %v913 = vunpack.c.l.b16 %v875
    %v914 = vunpack.c.l.b16 %v876
    %v915 = vunpack.c.l.b16 %v877
    %v916 = vunpack.c.l.b16 %v878
    %v917 = vunpack.c.l.b16 %v879
    %v918 = vunpack.c.l.b16 %v880
    %v919 = vpack.c.b16 %v904, %v903
    %v920 = vpack.c.b16 %v906, %v905
    %v921 = vpack.c.b16 %v908, %v907
    %v922 = vpack.c.b16 %v910, %v909
    %v923 = vpack.c.b16 %v912, %v911
    %v924 = vpack.c.b16 %v914, %v913
    %v925 = vpack.c.b16 %v916, %v915
    %v926 = vpack.c.b16 %v918, %v917
    %935 = vmatprep.subr.bf16.mxu0 0
    %936 = vmatpush1.bf16.msra.mxu0 %v919
    %937 = vmatprep.subr.bf16.mxu0 0
    %938 = vmatpush1.bf16.msra.mxu0 %v920
    %939 = vmatprep.subr.bf16.mxu0 0
    %940 = vmatpush1.bf16.msra.mxu0 %v921
    %941 = vmatprep.subr.bf16.mxu0 0
    %942 = vmatpush1.bf16.msra.mxu0 %v922
    %943 = vmatprep.subr.bf16.mxu0 0
    %944 = vmatpush1.bf16.msra.mxu0 %v923
    %945 = vmatprep.subr.bf16.mxu0 0
    %946 = vmatpush1.bf16.msra.mxu0 %v924
    %947 = vmatprep.subr.bf16.mxu0 0
    %948 = vmatpush1.bf16.msra.mxu0 %v925
    %949 = vmatprep.subr.bf16.mxu0 0
    %950 = vmatpush1.bf16.msra.mxu0 %v926
    %951 = vmatprep.subr.bf16.mxu0 0
    %952 = vmatpush1.bf16.msra.mxu0 0
    %953 = vmatprep.subr.bf16.mxu0 0
    %954 = vmatpush1.bf16.msra.mxu0 0
    %955 = vmatprep.subr.bf16.mxu0 0
    %956 = vmatpush1.bf16.msra.mxu0 0
    %957 = vmatprep.subr.bf16.mxu0 0
    %958 = vmatpush1.bf16.msra.mxu0 0
    %959 = vmatprep.subr.bf16.mxu0 0
    %960 = vmatpush1.bf16.msra.mxu0 0
    %961 = vmatprep.subr.bf16.mxu0 0
    %962 = vmatpush1.bf16.msra.mxu0 0
    %963 = vmatprep.subr.bf16.mxu0 0
    %964 = vmatpush1.bf16.msra.mxu0 0
    %965 = vmatprep.subr.bf16.mxu0 0
    %966 = vmatpush1.bf16.msra.mxu0 0
    %967 = vmatprep.mubr.bf16.mxu0 0
    %968 = vmatmul.mubr.bf16.gmra.mrb[0].mxu0 %v882
    %v969 = vpop.f32.mrb[0].mxu0
    %v970 = vadd.f32 %v886, %v969
    %v971 = vpop.f32.mrb[0].mxu0
    %v972 = vpop.f32.mrb[0].mxu0
    %v973 = vpop.f32.mrb[0].mxu0
    %974 = vdwg.mxu0
    %976 = vrot.lane.b32.xlu0 %v970, 112
    %v977 = vpop.permute.xlu0 %976
    %v979 = vmax.f32 %v970, %v977
    %980 = vrot.lane.b32.xlu0 %v970, 96
    %v981 = vpop.permute.xlu0 %980
    %v983 = vmax.f32 %v979, %v981
    %984 = vrot.lane.b32.xlu0 %v970, 80
    %v985 = vpop.permute.xlu0 %984
    %v987 = vmax.f32 %v983, %v985
    %v988 = vsub.f32 %v970, %v987
    %v989 = vmul.f32 %v988, 1.442695
    %v990 = vpow.pop %v989
    %992 = vrot.lane.b32.xlu0 %v987, 16
    %v993 = vpop.permute.xlu0 %992
    %v995 = vsub.f32 %v970, %v993
    %v996 = vmul.f32 %v995, 1.442695
    %v997 = vpow.pop %v996
    %998 = vrot.lane.b32.xlu0 %v987, 32
    %v999 = vpop.permute.xlu0 %998
    %v1001 = vsub.f32 %v970, %v999
    %v1002 = vmul.f32 %v1001, 1.442695
    %v1003 = vpow.pop %v1002
    %1004 = vrot.lane.b32.xlu0 %v987, 48
    %v1005 = vpop.permute.xlu0 %1004
    %v1007 = vsub.f32 %v970, %v1005
    %v1008 = vmul.f32 %v1007, 1.442695
    %v1009 = vpow.pop %v1008
    %1011 = vrot.lane.b32.xlu0 %v997, 112
    %v1012 = vpop.permute.xlu0 %1011
    %v1014 = vadd.f32 %v990, %v1012
    %1016 = vrot.lane.b32.xlu0 %v1003, 96
    %v1017 = vpop.permute.xlu0 %1016
    %v1019 = vadd.f32 %v1014, %v1017
    %1021 = vrot.lane.b32.xlu0 %v1009, 80
    %v1022 = vpop.permute.xlu0 %1021
    %v1024 = vadd.f32 %v1019, %v1022
    %v1025 = vrcp.pop %v1024
    %v1026 = vmul.f32 %v990, %v1025
    %vm1027 = vcmask 123904
    %1028 = vst.msk [vmem:[%s4] sm:$0x3] %vm1027, %v1026
    %1030 = vrot.lane.b32.xlu0 %v1025, 16
    %v1031 = vpop.permute.xlu0 %1030
    %v1033 = vmul.f32 %v997, %v1031
    %vm1034 = vcmask 255104
    %1035 = vst.msk [vmem:[%s4] sm:$0x3] %vm1034, %v1033
    %1036 = vrot.lane.b32.xlu0 %v1025, 32
    %v1037 = vpop.permute.xlu0 %1036
    %v1039 = vmul.f32 %v1003, %v1037
    %vm1040 = vcmask 386304
    %1041 = vst.msk [vmem:[%s4] sm:$0x3] %vm1040, %v1039
    %1042 = vrot.lane.b32.xlu0 %v1025, 48
    %v1043 = vpop.permute.xlu0 %1042
    %v1045 = vmul.f32 %v1009, %v1043
    %vm1046 = vcmask 517504
    %1047 = vst.msk [vmem:[%s4] sm:$0x3] %vm1046, %v1045
    %1049 = vrot.lane.b32.xlu0 %v462, 64
    %v1050 = vpop.permute.xlu0 %1049
    %vm1052 = vcmask 648704
    %1053 = vst.msk [vmem:[%s4] sm:$0x3] %vm1052, %v1050
    %1055 = vrot.lane.b32.xlu0 %v457, 64
    %v1056 = vpop.permute.xlu0 %1055
    %vm1058 = vcmask 779904
    %1059 = vst.msk [vmem:[%s4] sm:$0x3] %vm1058, %v1056
    %vm1060 = vcmask 1042176
    %1061 = vst.msk [vmem:[%s4] sm:$0x3] %vm1060, 0.0
    // Predicated region
    $region26: #{fused_forward.1} parent=1 // pred_check
      _
    $region27: #{fused_forward.1} parent=1 // pred_check_branch
      %1063 = sbr.rel (0) target = $region29
    $region28: #{fused_forward.1} parent=1 // pred_region
      _
    $region29: #{fused_forward.1} parent=1 // pred_fallthru
      _
    // Predicated region
    $region30: #{fused_forward.1} parent=1 // pred_check
      _
    $region31: #{fused_forward.1} parent=1 // pred_check_branch
      %1065 = sbr.rel (0) target = $region33
    $region32: #{fused_forward.1} parent=1 // pred_region
      _
    $region33: #{fused_forward.1} parent=1 // pred_fallthru
      _
    %1066 = vsyncpa [#allocation3], 1
    %1067 = vsyncpa [#allocation5], 1

</llo_original>
